<compile_context>
chip_gen: v7x
topology: tpu7x:2x2x1
jax: 0.10.0
libtpu: 0.0.40
codegen_flags: <defaults>
</compile_context>

<pallas_src>
import jax
import jax.numpy as jnp
from jax.experimental import pallas as pl
from jax.experimental.pallas import tpu as pltpu

_LANE = 128
_TARGET_TILE_BYTES = 4 * 1024 * 1024   # ~4 MiB per operand per grid step


def _rgb_fusion_kernel(alpha_ref, x1_ref, x2_ref, out_ref):
    # alpha lives in SMEM as f32; cast to the tile dtype so 16-bit tiles stay
    # in packed vregs instead of upcasting whole tiles to f32.
    alpha = alpha_ref[0, 0].astype(x1_ref.dtype)
    out_ref[...] = (x1_ref[...] + alpha * x2_ref[...]).astype(out_ref.dtype)


def _choose_tiling(total, itemsize):
    """Pick (cols, row_block) for a lane-dense 2-D view of `total` elements.

    Prefers a column count that divides `total` exactly (no tail).  Any cols
    that is a multiple of 128 gives fully contiguous full-width blocks, so
    divisibility is preferred over maximal width.  Row block targets ~4 MiB
    per operand and is a multiple of the packed-sublane granularity.
    """
    cols = None
    for c in (1024, 512, 256, 128):
        if total % c == 0:
            cols = c
            break
    if cols is None:                       # unaligned total -> prefix + tiny tail
        cols = 1024
        while cols > _LANE and total < cols * 8:
            cols //= 2

    sub = max(8, 32 // itemsize)           # 8 (f32), 16 (bf16/f16), 32 (int8)
    rows = total // cols                   # rows of the aligned prefix

    target_rows = max(sub, (_TARGET_TILE_BYTES // (cols * itemsize)) // sub * sub)
    if rows <= target_rows:
        if rows > 64:
            # Split into >= 2 grid steps so both v7x TensorCores get work.
            half = -(-rows // 2)
            row_block = -(-half // sub) * sub
        else:
            row_block = rows               # single full-extent block (legal)
    else:
        row_block = target_rows
    return cols, row_block


def rgb_fusion_forward(x1, x2, alpha):
    """out = x1 + alpha * x2, elementwise over tensors of identical shape/dtype."""
    assert x1.shape == x2.shape, "elementwise fusion requires matching shapes"
    assert x1.dtype == x2.dtype, "mixed input dtypes are not supported"
    orig_shape = x1.shape
    dtype = x1.dtype
    itemsize = jnp.dtype(dtype).itemsize

    total = 1
    for d in orig_shape:
        total *= d

    cols, row_block = _choose_tiling(total, itemsize)
    rows = total // cols
    main = rows * cols

    flat1 = x1.reshape(-1)
    flat2 = x2.reshape(-1)
    alpha_f32 = jnp.asarray(alpha, dtype=jnp.float32)

    if rows == 0:
        # Tiny input (< one lane-dense row): plain JAX elementwise.
        return (flat1 + alpha_f32.astype(dtype) * flat2).reshape(orig_shape)

    if main == total:
        x1_2d = flat1.reshape(rows, cols)          # zero-copy view
        x2_2d = flat2.reshape(rows, cols)
    else:
        x1_2d = flat1[:main].reshape(rows, cols)   # aligned prefix
        x2_2d = flat2[:main].reshape(rows, cols)

    alpha_arr = alpha_f32.reshape(1, 1)
    grid = (pl.cdiv(rows, row_block),)             # partial trailing block is masked

    out_2d = pl.pallas_call(
        _rgb_fusion_kernel,
        out_shape=jax.ShapeDtypeStruct((rows, cols), dtype),
        grid_spec=pl.GridSpec(
            grid=grid,
            in_specs=[
                pl.BlockSpec(memory_space=pltpu.MemorySpace.SMEM),    # alpha
                pl.BlockSpec((row_block, cols), lambda i: (i, 0)),    # x1
                pl.BlockSpec((row_block, cols), lambda i: (i, 0)),    # x2
            ],
            out_specs=pl.BlockSpec((row_block, cols), lambda i: (i, 0)),
        ),
        compiler_params=pltpu.CompilerParams(
            dimension_semantics=("parallel",),
            vmem_limit_bytes=32 * 1024 * 1024,
        ),
    )(alpha_arr, x1_2d, x2_2d)

    if main == total:
        return out_2d.reshape(orig_shape)

    # Tiny unaligned tail (< cols elements): plain JAX, then stitch back on.
    tail = flat1[main:] + alpha_f32.astype(dtype) * flat2[main:]
    out_flat = jnp.concatenate([out_2d.reshape(-1), tail])
    return out_flat.reshape(orig_shape)


if __name__ == "__main__":
    # Mirrors nn.Parameter(torch.tensor(1.0))
    alpha = jnp.float32(1.0)

    key = jax.random.PRNGKey(0)
    k1, k2, k3, k4, k5, k6 = jax.random.split(key, 6)

    # Case 1: small NCHW, 128-aligned total (2*4*16*16 = 2048 elements) ->
    # zero-copy reshape, single full-extent block.
    x1 = jax.random.normal(k1, (2, 4, 16, 16), dtype=jnp.float32)
    x2 = jax.random.normal(k2, (2, 4, 16, 16), dtype=jnp.float32)
    out = jax.block_until_ready(rgb_fusion_forward(x1, x2, alpha))
    ref = x1 + alpha * x2
    assert out.shape == ref.shape and out.dtype == ref.dtype
    assert jnp.allclose(out, ref, atol=1e-5, rtol=1e-5)

    # Case 2: non-128-multiple total -> aligned prefix through the kernel,
    # tiny tail in plain JAX (no padding passes).
    y1 = jax.random.normal(k3, (2, 3, 17, 17), dtype=jnp.float32)
    y2 = jax.random.normal(k4, (2, 3, 17, 17), dtype=jnp.float32)
    out_y = jax.block_until_ready(rgb_fusion_forward(y1, y2, alpha))
    ref_y = y1 + alpha * y2
    assert jnp.allclose(out_y, ref_y, atol=1e-5, rtol=1e-5)

    # Case 3: 2*8*200*200 = 640000 elements -> 625 rows x 1024 cols, grid of 2
    # with a masked partial trailing block (no row padding).
    z1 = jax.random.normal(k5, (2, 8, 200, 200), dtype=jnp.float32)
    z2 = jax.random.normal(k6, (2, 8, 200, 200), dtype=jnp.float32)
    out_z = jax.block_until_ready(rgb_fusion_forward(z1, z2, alpha))
    ref_z = z1 + alpha * z2
    assert jnp.allclose(out_z, ref_z, atol=1e-5, rtol=1e-5)

    # Case 4: bf16 inputs -> alpha cast to bf16 in-kernel, packed stores.
    b1 = jax.random.normal(k1, (2, 4, 32, 32), dtype=jnp.bfloat16)
    b2 = jax.random.normal(k2, (2, 4, 32, 32), dtype=jnp.bfloat16)
    out_b = jax.block_until_ready(rgb_fusion_forward(b1, b2, alpha))
    ref_b = b1 + jnp.asarray(alpha, jnp.bfloat16) * b2
    assert out_b.dtype == jnp.bfloat16
    assert jnp.allclose(out_b.astype(jnp.float32), ref_b.astype(jnp.float32),
                        atol=1e-2, rtol=1e-2)

    print("KERNEL_OK")
</pallas_src>

<mosaic_0001>
module attributes {stable_mosaic.version = 11 : i64} {
  func.func @_rgb_fusion_kernel(%arg0: i32, %arg1: memref<1x1xf32, #tpu.memory_space<smem>>, %arg2: memref<2x1024xf32, #tpu.memory_space<vmem>>, %arg3: memref<2x1024xf32, #tpu.memory_space<vmem>>, %arg4: memref<2x1024xf32, #tpu.memory_space<vmem>>) attributes {dimension_semantics = [#tpu.dimension_semantics<parallel>], iteration_bounds = array<i64: 1>, scalar_prefetch = 0 : i64, scratch_operands = 0 : i64, tpu.core_type = #tpu.core_type<tc>, window_params = [{transform_indices = @transform_0, window_bounds = array<i64: 1, 1>}, {transform_indices = @transform_1, window_bounds = array<i64: 2, 1024>}, {transform_indices = @transform_2, window_bounds = array<i64: 2, 1024>}, {transform_indices = @transform_3, window_bounds = array<i64: 2, 1024>}]} {
    %c0 = arith.constant 0 : index
    %c0_0 = arith.constant 0 : index
    %0 = memref.load %arg1[%c0, %c0_0] : memref<1x1xf32, #tpu.memory_space<smem>>
    %c0_1 = arith.constant 0 : index
    %c0_2 = arith.constant 0 : index
    %1 = vector.load %arg2[%c0_1, %c0_2] : memref<2x1024xf32, #tpu.memory_space<vmem>>, vector<2x1024xf32>
    %c0_3 = arith.constant 0 : index
    %c0_4 = arith.constant 0 : index
    %2 = vector.load %arg3[%c0_3, %c0_4] : memref<2x1024xf32, #tpu.memory_space<vmem>>, vector<2x1024xf32>
    %3 = vector.broadcast %0 : f32 to vector<2x1024xf32>
    %4 = arith.mulf %3, %2 : vector<2x1024xf32>
    %5 = arith.addf %1, %4 : vector<2x1024xf32>
    %c0_5 = arith.constant 0 : index
    %c0_6 = arith.constant 0 : index
    %6 = vector.load %arg4[%c0_5, %c0_6] : memref<2x1024xf32, #tpu.memory_space<vmem>>, vector<2x1024xf32>
    tpu.vector_store %arg4[%c0_5, %c0_6], %5 {strides = array<i32>} : memref<2x1024xf32, #tpu.memory_space<vmem>>, vector<2x1024xf32>,
    return
  }
  func.func @transform_0(%arg0: i32) -> (i32, i32) {
    %c0_i32 = arith.constant 0 : i32
    %c0_i32_0 = arith.constant 0 : i32
    %c0_i32_1 = arith.constant 0 : i32
    return %c0_i32, %c0_i32_0 : i32, i32
  }
  func.func @transform_1(%arg0: i32) -> (i32, i32) {
    %c0_i32 = arith.constant 0 : i32
    %c0_i32_0 = arith.constant 0 : i32
    return %arg0, %c0_i32 : i32, i32
  }
  func.func @transform_2(%arg0: i32) -> (i32, i32) {
    %c0_i32 = arith.constant 0 : i32
    %c0_i32_0 = arith.constant 0 : i32
    return %arg0, %c0_i32 : i32, i32
  }
  func.func @transform_3(%arg0: i32) -> (i32, i32) {
    %c0_i32 = arith.constant 0 : i32
    %c0_i32_0 = arith.constant 0 : i32
    return %arg0, %c0_i32 : i32, i32
  }
}

</mosaic_0001>

<llo_original>
// kernel: tpu_custom_call.1
$region0: #{tpu_custom_call.1}
  #allocation0 [shape = 'u32[]', space=smem, size = 0x4, offset = 0x4, fixed_abs, tag = 'smem constant byte address 0x4 - core index']
  #allocation1 [shape = 'u32[144,128]{1,0:T(1,128)}', space=vmem, size = 0x12000, scoped, tag = 'internal scratch']
  #allocation2 [shape = 'f32[1,1]{1,0:T(1,128)S(6)}', space=smem, size = 0x200, scoped, tag = 'scoped memory for tpu_custom_call.1']
  %s0 = inlined_call_operand.<no memory space> [shape: f32[1,1], index: 0, kind: input, shape index: {}]
  %s1 = inlined_call_operand.hbm [shape: f32[2,1024], index: 1, kind: input, shape index: {}]
  %s2 = inlined_call_operand.hbm [shape: f32[2,1024], index: 2, kind: input, shape index: {}]
  %s3 = inlined_call_operand.hbm [shape: f32[2,1024], index: 3, kind: output, shape index: {}]
  %s4 = sld [smem:[#allocation0]]
  $region30: #{tpu_custom_call.1} parent=0
    _
  %s6 = ssub.s32 1, %s4
  %s7 = scalar_select 0, %s6, %s4
  %8 = sst [smem:[#allocation2]] %s0
  $region1: #{tpu_custom_call.1} parent=0
    #allocation3 [shape = 'u8[8192]{0}', space=vmem, size = 0x2000, scoped, tag = 'input window, operand 1, single buffered']
    #allocation4 [shape = 's32[1]{0}', space=sflag, size = 0x4, scoped, tag = 'scoped memory for tpu_custom_call.1']
    #allocation5 [shape = 's32[1]{0}', space=sflag, size = 0x4, scoped, tag = 'scoped memory for tpu_custom_call.1']
    #allocation6 [shape = 'u8[8192]{0}', space=vmem, size = 0x2000, scoped, tag = 'input window, operand 2, single buffered']
    #allocation7 [shape = 's32[1]{0}', space=sflag, size = 0x4, scoped, tag = 'scoped memory for tpu_custom_call.1']
    #allocation8 [shape = 'u8[8192]{0}', space=vmem, size = 0x2000, scoped, tag = 'output window, operand 0, single buffered']
    %9 = vsyncpa [#allocation4], 0
    %10 = vsyncpa [#allocation7], 0
    %11 = vsyncpa [#allocation5], 0
    // Predicated region
    $region2: #{tpu_custom_call.1} parent=1 // pred_check
      _
    $region3: #{tpu_custom_call.1} parent=1 // pred_check_branch
      %13 = sbr.rel (0) target = $region5
    $region4: #{tpu_custom_call.1} parent=1 // pred_region
      _
    $region5: #{tpu_custom_call.1} parent=1 // pred_fallthru
      _
    // Predicated region
    $region6: #{tpu_custom_call.1} parent=1 // pred_check
      _
    $region7: #{tpu_custom_call.1} parent=1 // pred_check_branch
      %15 = sbr.rel (0) target = $region9
    $region8: #{tpu_custom_call.1} parent=1 // pred_region
      %s17 = ssub.s32 256, 256
      %18 = vsyncadd [#allocation4], %s17
      %s20 = sshll.u32 [#allocation3], 4
      %s21 = int_to_ptr.vmem [resolvable:$true] %s20
      %23 = dma.hbm_to_vmem [thread:$0]  %s1, 256, %s21, [#allocation4]
    $region9: #{tpu_custom_call.1} parent=1 // pred_fallthru
      _
    // Predicated region
    $region10: #{tpu_custom_call.1} parent=1 // pred_check
      _
    $region11: #{tpu_custom_call.1} parent=1 // pred_check_branch
      %25 = sbr.rel (0) target = $region13
    $region12: #{tpu_custom_call.1} parent=1 // pred_region
      %s27 = ssub.s32 256, 256
      %28 = vsyncadd [#allocation7], %s27
      %s30 = sshll.u32 [#allocation6], 4
      %s31 = int_to_ptr.vmem [resolvable:$true] %s30
      %33 = dma.hbm_to_vmem [thread:$0]  %s2, 256, %s31, [#allocation7]
    $region13: #{tpu_custom_call.1} parent=1 // pred_fallthru
      _
    // Predicated region
    $region14: #{tpu_custom_call.1} parent=1 // pred_check
      _
    $region15: #{tpu_custom_call.1} parent=1 // pred_check_branch
      %35 = sbr.rel (0) target = $region17
    $region16: #{tpu_custom_call.1} parent=1 // pred_region
      %36 = dma.done [#allocation4], 256
    $region17: #{tpu_custom_call.1} parent=1 // pred_fallthru
      _
    // Predicated region
    $region18: #{tpu_custom_call.1} parent=1 // pred_check
      _
    $region19: #{tpu_custom_call.1} parent=1 // pred_check_branch
      %38 = sbr.rel (0) target = $region21
    $region20: #{tpu_custom_call.1} parent=1 // pred_region
      %39 = dma.done [#allocation7], 256
    $region21: #{tpu_custom_call.1} parent=1 // pred_fallthru
      _
    %s40 = sld [smem:[#allocation2]]
    %v41 = vld [vmem:[#allocation3] sm:$0xff]
    %v42 = vld [vmem:[#allocation3 + $0x8] sm:$0xff]
    %v43 = vld [vmem:[#allocation6] sm:$0xff]
    %v44 = vld [vmem:[#allocation6 + $0x8] sm:$0xff]
    %v45 = vstv %s40
    %v46 = vmul.f32 %v45, %v43
    %v47 = vmul.f32 %v45, %v44
    %v48 = vadd.f32 %v41, %v46
    %v49 = vadd.f32 %v42, %v47
    %50 = vst [vmem:[#allocation8] sm:$0xff] %v48
    %51 = vst [vmem:[#allocation8 + $0x8] sm:$0xff] %v49
    // Predicated region
    $region22: #{tpu_custom_call.1} parent=1 // pred_check
      _
    $region23: #{tpu_custom_call.1} parent=1 // pred_check_branch
      %53 = sbr.rel (0) target = $region25
    $region24: #{tpu_custom_call.1} parent=1 // pred_region
      %s55 = ssub.s32 256, 256
      %56 = vsyncadd [#allocation5], %s55
      %s58 = sshll.u32 [#allocation8], 4
      %s59 = int_to_ptr.vmem [resolvable:$true] %s58
      %61 = dma.vmem_to_hbm [thread:$0]  %s59, 256, %s3, [#allocation5]
    $region25: #{tpu_custom_call.1} parent=1 // pred_fallthru
      _
    // Predicated region
    $region26: #{tpu_custom_call.1} parent=1 // pred_check
      _
    $region27: #{tpu_custom_call.1} parent=1 // pred_check_branch
      %63 = sbr.rel (0) target = $region29
    $region28: #{tpu_custom_call.1} parent=1 // pred_region
      %64 = dma.done [#allocation5], 256
    $region29: #{tpu_custom_call.1} parent=1 // pred_fallthru
      _
    %65 = vsyncpa [#allocation4], 1
    %66 = vsyncpa [#allocation7], 1
    %67 = vsyncpa [#allocation5], 1

</llo_original>
